<compile_context>
chip_gen: v5e
topology: v5e:2x2
jax: 0.10.0
libtpu: 0.0.40
codegen_flags: <defaults>
</compile_context>

<pallas_src>
import functools

import jax
import jax.numpy as jnp
from jax.experimental import pallas as pl
from jax.experimental.pallas import tpu as pltpu


def _apply_activation(h, name):
    if name == "relu":
        return jnp.maximum(h, 0.0)
    if name == "tanh":
        return jnp.tanh(h)
    if name == "sigmoid":
        # exp + approximate reciprocal both issue on the (otherwise idle) EUP slot.
        e = jnp.exp(-h)
        return pl.reciprocal(1.0 + e, approx=True)
    if name == "leaky_relu":
        return jnp.where(h > 0, h, 0.01 * h)
    raise ValueError(f"unknown activation: {name}")


def testnet_kernel(x_ref, w1_ref, b1_ref, w2_ref, b2_ref, o_ref, *, activation):
    # x_ref:  (1, Np)  VMEM  lane-dense batch
    # w1_ref: (10, 1)  VMEM  layer1 weight (PyTorch-native column)
    # b1_ref: (10, 1)  VMEM  layer1 bias
    # w2_ref: (10, 1)  VMEM  layer2 weight (transposed host-side, one time)
    # b2_ref: (1, 1)   SMEM  layer2 bias (scalar path)
    # o_ref:  (1, Np)  VMEM
    x = x_ref[...]                                        # (1, Np)
    h = w1_ref[...] * x + b1_ref[...]                     # (10, Np) broadcast FMA (VPU)
    h = _apply_activation(h, activation)
    y = jnp.sum(h * w2_ref[...], axis=0, keepdims=True)   # (1, Np) sublane reduce (XLU)
    o_ref[...] = y + b2_ref[0, 0]


def testnet_forward(x, w1, b1, w2, b2, *, activation="relu"):
    """Forward pass of TestNet.

    x:  (N, 1) or (N,) float32 batch.
    w1: (10, 1) layer1 weight (PyTorch-native), b1: (10,) layer1 bias.
    w2: (1, 10) layer2 weight (PyTorch-native), b2: (1,) layer2 bias.
    Returns (N, 1) float32.
    """
    x_flat = x.reshape(-1).astype(jnp.float32)
    n = x_flat.shape[0]
    n_pad = ((n + 127) // 128) * 128                      # lane-dense, multiple of 128

    # One-time host-side layout prep (no in-kernel relayout needed).
    x_lanes = jnp.zeros((1, n_pad), jnp.float32).at[0, :n].set(x_flat)
    w1_col = w1.reshape(10, 1).astype(jnp.float32)
    b1_col = b1.reshape(10, 1).astype(jnp.float32)
    w2_col = w2.reshape(10, 1).astype(jnp.float32)        # (1, 10) -> (10, 1)
    b2_2d = b2.reshape(1, 1).astype(jnp.float32)

    kernel = functools.partial(testnet_kernel, activation=activation)
    out = pl.pallas_call(
        kernel,
        out_shape=jax.ShapeDtypeStruct((1, n_pad), jnp.float32),
        # Grid-less: every operand is a single full-array block (tiny model, N=200).
        # TODO(synk): if N grows beyond a few thousand, add a 1-D lane-blocked grid
        # over the batch (blocks >= 512 lanes) with dimension_semantics=("parallel",)
        # so v7x shards it across both TensorCores and the DMA pipeline kicks in.
        in_specs=[
            pl.BlockSpec(memory_space=pltpu.MemorySpace.VMEM),   # x  (1, Np)
            pl.BlockSpec(memory_space=pltpu.MemorySpace.VMEM),   # w1 (10, 1)
            pl.BlockSpec(memory_space=pltpu.MemorySpace.VMEM),   # b1 (10, 1)
            pl.BlockSpec(memory_space=pltpu.MemorySpace.VMEM),   # w2 (10, 1)
            pl.BlockSpec(memory_space=pltpu.MemorySpace.SMEM),   # b2 (1, 1) scalar
        ],
        out_specs=pl.BlockSpec(memory_space=pltpu.MemorySpace.VMEM),
    )(x_lanes, w1_col, b1_col, w2_col, b2_2d)

    return out[0, :n].reshape(n, 1)


def _reference(x, w1, b1, w2, b2, activation):
    """Pure-JAX reference matching PyTorch Linear semantics (y = x @ W.T + b)."""
    h = x @ w1.T + b1.reshape(1, -1)                      # (N, 10)
    if activation == "relu":
        h = jnp.maximum(h, 0.0)
    elif activation == "tanh":
        h = jnp.tanh(h)
    elif activation == "sigmoid":
        h = jax.nn.sigmoid(h)
    elif activation == "leaky_relu":
        h = jnp.where(h > 0, h, 0.01 * h)
    return h @ w2.T + b2.reshape(1, -1)                   # (N, 1)


if __name__ == "__main__":
    key = jax.random.PRNGKey(0)
    k1, k2, k3, k4 = jax.random.split(key, 4)

    # nn.Linear(1, 10): weight (10, 1), bias (10,).
    lim1 = 1.0                       # 1/sqrt(in_features=1)
    w1 = jax.random.uniform(k1, (10, 1), jnp.float32, -lim1, lim1)
    b1 = jax.random.uniform(k2, (10,), jnp.float32, -lim1, lim1)
    # nn.Linear(10, 1): weight (1, 10), bias (1,).
    lim2 = 1.0 / jnp.sqrt(10.0)
    w2 = jax.random.uniform(k3, (1, 10), jnp.float32, -lim2, lim2)
    b2 = jax.random.uniform(k4, (1,), jnp.float32, -lim2, lim2)

    # Input matching the script: x = torch.linspace(-5, 5, 200), fed as (N, 1).
    n = 200
    x = jnp.linspace(-5.0, 5.0, n, dtype=jnp.float32).reshape(n, 1)

    # Check every activation branch used by the comparison script.
    tolerances = {"relu": 1e-5, "leaky_relu": 1e-5, "tanh": 1e-4, "sigmoid": 5e-3}
    for act, tol in tolerances.items():
        out = jax.block_until_ready(
            testnet_forward(x, w1, b1, w2, b2, activation=act))
        ref = _reference(x, w1, b1, w2, b2, act)
        assert out.shape == (n, 1), (act, out.shape)
        assert jnp.allclose(out, ref, atol=tol, rtol=tol), act

    print("KERNEL_OK")
</pallas_src>

<mosaic_0001>
module attributes {stable_mosaic.version = 11 : i64} {
  func.func @testnet_kernel(%arg0: memref<1x256xf32, #tpu.memory_space<vmem>>, %arg1: memref<10x1xf32, #tpu.memory_space<vmem>>, %arg2: memref<10x1xf32, #tpu.memory_space<vmem>>, %arg3: memref<10x1xf32, #tpu.memory_space<vmem>>, %arg4: memref<1x1xf32, #tpu.memory_space<smem>>, %arg5: memref<1x256xf32, #tpu.memory_space<vmem>>) attributes {dimension_semantics = [], scalar_prefetch = 0 : i64, scratch_operands = 0 : i64, tpu.core_type = #tpu.core_type<tc>} {
    %c0 = arith.constant 0 : index
    %c0_0 = arith.constant 0 : index
    %0 = vector.load %arg0[%c0, %c0_0] : memref<1x256xf32, #tpu.memory_space<vmem>>, vector<1x256xf32>
    %c0_1 = arith.constant 0 : index
    %c0_2 = arith.constant 0 : index
    %1 = vector.load %arg1[%c0_1, %c0_2] : memref<10x1xf32, #tpu.memory_space<vmem>>, vector<10x1xf32>
    %2 = vector.broadcast %1 : vector<10x1xf32> to vector<10x256xf32>
    %3 = vector.broadcast %0 : vector<1x256xf32> to vector<10x256xf32>
    %4 = arith.mulf %2, %3 : vector<10x256xf32>
    %c0_3 = arith.constant 0 : index
    %c0_4 = arith.constant 0 : index
    %5 = vector.load %arg2[%c0_3, %c0_4] : memref<10x1xf32, #tpu.memory_space<vmem>>, vector<10x1xf32>
    %6 = vector.broadcast %5 : vector<10x1xf32> to vector<10x256xf32>
    %7 = arith.addf %4, %6 : vector<10x256xf32>
    %cst = arith.constant 0.000000e+00 : f32
    %8 = vector.broadcast %cst : f32 to vector<10x256xf32>
    %9 = arith.maximumf %7, %8 : vector<10x256xf32>
    %c0_5 = arith.constant 0 : index
    %c0_6 = arith.constant 0 : index
    %10 = vector.load %arg3[%c0_5, %c0_6] : memref<10x1xf32, #tpu.memory_space<vmem>>, vector<10x1xf32>
    %11 = vector.broadcast %10 : vector<10x1xf32> to vector<10x256xf32>
    %12 = arith.mulf %9, %11 : vector<10x256xf32>
    %cst_7 = arith.constant dense<0.000000e+00> : vector<256xf32>
    %13 = vector.multi_reduction <add>, %12, %cst_7 [0] : vector<10x256xf32> to vector<256xf32>
    %14 = vector.shape_cast %13 : vector<256xf32> to vector<1x256xf32>
    %c0_8 = arith.constant 0 : index
    %c0_9 = arith.constant 0 : index
    %15 = memref.load %arg4[%c0_8, %c0_9] : memref<1x1xf32, #tpu.memory_space<smem>>
    %16 = vector.broadcast %15 : f32 to vector<1x256xf32>
    %17 = arith.addf %14, %16 : vector<1x256xf32>
    %c0_10 = arith.constant 0 : index
    %c0_11 = arith.constant 0 : index
    %18 = vector.load %arg5[%c0_10, %c0_11] : memref<1x256xf32, #tpu.memory_space<vmem>>, vector<1x256xf32>
    tpu.vector_store %arg5[%c0_10, %c0_11], %17 {strides = array<i32>} : memref<1x256xf32, #tpu.memory_space<vmem>>, vector<1x256xf32>,
    return
  }
}

</mosaic_0001>

<llo_original>
// kernel: tpu_custom_call.1
$region0: #{tpu_custom_call.1}
  #allocation0 [shape = 'u32[]', space=smem, size = 0x4, offset = 0x4, fixed_abs, tag = 'smem constant byte address 0x4 - core index']
  #allocation1 [shape = 'u32[72,128]{1,0:T(1,128)}', space=vmem, size = 0x9000, scoped, tag = 'internal scratch']
  #allocation2 [shape = 'f32[1,1]{1,0:T(1,128)S(6)}', space=smem, size = 0x200, scoped, tag = 'scoped memory for tpu_custom_call.1']
  %s0 = inlined_call_operand.vmem [shape: f32[1,256], index: 0, kind: input, shape index: {}]
  %s1 = inlined_call_operand.vmem [shape: f32[10,1], index: 1, kind: input, shape index: {}]
  %s2 = inlined_call_operand.vmem [shape: f32[10,1], index: 2, kind: input, shape index: {}]
  %s3 = inlined_call_operand.vmem [shape: f32[10,1], index: 3, kind: input, shape index: {}]
  %s4 = inlined_call_operand.<no memory space> [shape: f32[1,1], index: 4, kind: input, shape index: {}]
  %s5 = inlined_call_operand.hbm [shape: f32[1,256], index: 5, kind: output, shape index: {}]
  %s6 = sld [smem:[#allocation0]]
  $region30: #{tpu_custom_call.1} parent=0
    _
  %s8 = ssub.s32 1, %s6
  %s9 = scalar_select 0, %s8, %s6
  %10 = sst [smem:[#allocation2]] %s4
  $region1: #{tpu_custom_call.1} parent=0
    #allocation3 [shape = 'u8[1024]{0}', space=vmem, size = 0x400, scoped, tag = 'output window, operand 0, single buffered']
    #allocation4 [shape = 's32[1]{0}', space=sflag, size = 0x4, scoped, tag = 'scoped memory for tpu_custom_call.1']
    %11 = vsyncpa [#allocation4], 0
    // Predicated region
    $region2: #{tpu_custom_call.1} parent=1 // pred_check
      _
    $region3: #{tpu_custom_call.1} parent=1 // pred_check_branch
      %13 = sbr.rel (0) target = $region5
    $region4: #{tpu_custom_call.1} parent=1 // pred_region
      _
    $region5: #{tpu_custom_call.1} parent=1 // pred_fallthru
      _
    // Predicated region
    $region6: #{tpu_custom_call.1} parent=1 // pred_check
      _
    $region7: #{tpu_custom_call.1} parent=1 // pred_check_branch
      %15 = sbr.rel (0) target = $region9
    $region8: #{tpu_custom_call.1} parent=1 // pred_region
      _
    $region9: #{tpu_custom_call.1} parent=1 // pred_fallthru
      _
    // Predicated region
    $region10: #{tpu_custom_call.1} parent=1 // pred_check
      _
    $region11: #{tpu_custom_call.1} parent=1 // pred_check_branch
      %17 = sbr.rel (0) target = $region13
    $region12: #{tpu_custom_call.1} parent=1 // pred_region
      _
    $region13: #{tpu_custom_call.1} parent=1 // pred_fallthru
      _
    // Predicated region
    $region14: #{tpu_custom_call.1} parent=1 // pred_check
      _
    $region15: #{tpu_custom_call.1} parent=1 // pred_check_branch
      %19 = sbr.rel (0) target = $region17
    $region16: #{tpu_custom_call.1} parent=1 // pred_region
      _
    $region17: #{tpu_custom_call.1} parent=1 // pred_fallthru
      _
    // Predicated region
    $region18: #{tpu_custom_call.1} parent=1 // pred_check
      _
    $region19: #{tpu_custom_call.1} parent=1 // pred_check_branch
      %21 = sbr.rel (0) target = $region21
    $region20: #{tpu_custom_call.1} parent=1 // pred_region
      _
    $region21: #{tpu_custom_call.1} parent=1 // pred_fallthru
      _
    %v22 = vld [vmem:[%s0] sm:$0x3]
    %v23 = vld [vmem:[%s1] sm:$0xff]
    %v24 = vld [vmem:[%s1 + $0x8] sm:$0x3]
    %26 = vset.pattern.permute.xlu0 0
    %27 = vperm.xlu0 %26, %v23
    %v28 = vpop.permute.xlu0 %27
    %31 = vset.pattern.permute.xlu0 0
    %32 = vperm.xlu0 %31, %v24
    %v33 = vpop.permute.xlu0 %32
    %v36 = vperm.slane %v22, 0
    %v37 = vperm.slane %v22, 1
    %v40 = vmul.f32 %v28, %v36
    %v41 = vmul.f32 %v28, %v37
    %v42 = vmul.f32 %v33, %v36
    %v43 = vmul.f32 %v33, %v37
    %v44 = vld [vmem:[%s2] sm:$0xff]
    %v45 = vld [vmem:[%s2 + $0x8] sm:$0x3]
    %47 = vset.pattern.permute.xlu0 0
    %48 = vperm.xlu0 %47, %v44
    %v49 = vpop.permute.xlu0 %48
    %52 = vset.pattern.permute.xlu0 0
    %53 = vperm.xlu0 %52, %v45
    %v54 = vpop.permute.xlu0 %53
    %v56 = vadd.f32 %v40, %v49
    %v57 = vadd.f32 %v41, %v49
    %v58 = vadd.f32 %v42, %v54
    %v59 = vadd.f32 %v43, %v54
    %v60 = vmax.f32 %v56, 0.0
    %v61 = vmax.f32 %v57, 0.0
    %v62 = vmax.f32 %v58, 0.0
    %v63 = vmax.f32 %v59, 0.0
    %v64 = vld [vmem:[%s3] sm:$0xff]
    %v65 = vld [vmem:[%s3 + $0x8] sm:$0x3]
    %67 = vset.pattern.permute.xlu0 0
    %68 = vperm.xlu0 %67, %v64
    %v69 = vpop.permute.xlu0 %68
    %72 = vset.pattern.permute.xlu0 0
    %73 = vperm.xlu0 %72, %v65
    %v74 = vpop.permute.xlu0 %73
    %v76 = vmul.f32 %v60, %v69
    %v77 = vmul.f32 %v61, %v69
    %v78 = vmul.f32 %v62, %v74
    %v79 = vmul.f32 %v63, %v74
    %vm80 = vcmask 1041408
    %v81 = vsel %vm80, %v78, 0.0
    %v82 = vadd.f32 %v76, %v81
    %v83 = vrot.slane %v82, 4
    %v84 = vadd.f32 %v82, %v83
    %v85 = vrot.slane %v84, 2
    %v86 = vadd.f32 %v84, %v85
    %v87 = vrot.slane %v86, 1
    %v88 = vadd.f32 %v86, %v87
    %v89 = vsel %vm80, %v79, 0.0
    %v90 = vadd.f32 %v77, %v89
    %v91 = vrot.slane %v90, 4
    %v92 = vadd.f32 %v90, %v91
    %v93 = vrot.slane %v92, 2
    %v94 = vadd.f32 %v92, %v93
    %v95 = vrot.slane %v94, 1
    %v96 = vadd.f32 %v94, %v95
    %s97 = sld [smem:[#allocation2]]
    %v98 = vstv %s97
    %v99 = vadd.f32 %v88, %v98
    %v100 = vadd.f32 %v96, %v98
    %v103 = vrot.slane %v100, 7
    %vm104 = vcmask 1040384
    %v105 = vsel %vm104, %v99, %v103
    %v107 = vlaneseq
    %vm108 = vcmp.ge.s32.totalorder %v107, 0
    %vm109 = vcmp.lt.s32.totalorder %v107, 256
    %vm110 = vmand %vm108, %vm109
    %111 = vst.msk [vmem:[#allocation3] sm:$0x3] %vm110, %v105
    // Predicated region
    $region22: #{tpu_custom_call.1} parent=1 // pred_check
      _
    $region23: #{tpu_custom_call.1} parent=1 // pred_check_branch
      %113 = sbr.rel (0) target = $region25
    $region24: #{tpu_custom_call.1} parent=1 // pred_region
      %115 = vsyncadd [#allocation4], 0
      %s117 = sshll.u32 [#allocation3], 4
      %s118 = int_to_ptr.vmem [resolvable:$true] %s117
      %s119 = sshll.u32 %s5, 4
      %s120 = int_to_ptr.hbm [resolvable:$true] %s119
      %122 = dma.vmem_to_hbm [thread:$0]  %s118, 32, %s120, [#allocation4]
    $region25: #{tpu_custom_call.1} parent=1 // pred_fallthru
      _
    // Predicated region
    $region26: #{tpu_custom_call.1} parent=1 // pred_check
      _
    $region27: #{tpu_custom_call.1} parent=1 // pred_check_branch
      %124 = sbr.rel (0) target = $region29
    $region28: #{tpu_custom_call.1} parent=1 // pred_region
      %126 = dma.done [#allocation4], 32
    $region29: #{tpu_custom_call.1} parent=1 // pred_fallthru
      _
    %127 = vsyncpa [#allocation4], 1

</llo_original>
